<compile_context>
chip_gen: v5e
topology: v5e:2x2
jax: 0.10.0
libtpu: 0.0.40
codegen_flags: <defaults>
</compile_context>

<pallas_src>
import math

import jax
import jax.numpy as jnp
import numpy as np
from jax import lax
from jax.experimental import pallas as pl
from jax.experimental.pallas import tpu as pltpu

# ----------------------------------------------------------------------------
# Deterministic "parameters" of the module (from __init__ / wing_loss_kwargs).
# ----------------------------------------------------------------------------
OMEGA = 10.0          # wing_loss_kwargs["omega"]
EPSILON = 2.0         # wing_loss_kwargs["epsilon"]
W_MP = 0.2
W_SEG = 0.5           # unused in the reference forward (no seg loss is computed)
W_REG = 1.0           # unused in the reference forward
WING_C = OMEGA - OMEGA * math.log(1.0 + OMEGA / EPSILON)

# Static FAN-68 index sets used by eye_dis / lip_dis (pairs: up[i] <-> bot[i]).
EYE_UP_IDX = (37, 38, 43, 44)
EYE_BOT_IDX = (41, 40, 47, 46)
LIP_UP_IDX = (61, 62, 63)
LIP_BOT_IDX = (67, 66, 65)
N_EYE = len(EYE_UP_IDX)
N_LIP = len(LIP_UP_IDX)
N_PAIR = N_EYE + N_LIP


def _pair_diff_matrix(fan_flat_n: int) -> np.ndarray:
    """Constant [fan_flat_n, 2*N_PAIR] +/-1 matrix: fan_row @ D gives, per batch row,
    (x_up - x_bot) for the 7 pairs in columns [0:7] and (y_up - y_bot) in [7:14]."""
    pairs = list(zip(EYE_UP_IDX + LIP_UP_IDX, EYE_BOT_IDX + LIP_BOT_IDX))
    d = np.zeros((fan_flat_n, 2 * N_PAIR), np.float32)
    for j, (u, b) in enumerate(pairs):
        d[2 * u, j] = 1.0
        d[2 * b, j] = -1.0
        d[2 * u + 1, j + N_PAIR] = 1.0
        d[2 * b + 1, j + N_PAIR] = -1.0
    return d


# ----------------------------------------------------------------------------
# Kernel factory (all sizes / weights are compile-time constants).
# ----------------------------------------------------------------------------
def _make_kernel(B, mp_n, fan_n, iris_n, expr_n):
    inv_mp = 1.0 / (B * mp_n)
    inv_fan = W_MP / (B * fan_n)
    inv_iris = 1.0 / (B * iris_n)
    inv_expr = 0.1 / (B * expr_n)
    inv_eye = 0.1 / (B * N_EYE)
    inv_lip = 0.1 / (B * N_LIP)

    def wing_sum(p, t):
        d = jnp.abs(p - t)
        w = jnp.where(d < OMEGA, OMEGA * jnp.log1p(d * (1.0 / EPSILON)), d - WING_C)
        return jnp.sum(w)

    def kernel(mp_p_ref, mp_t_ref, fan_p_ref, fan_t_ref,
               iris_p_ref, iris_t_ref, expr_ref, dxy_ref, out_ref):
        # ---- WingLoss terms: fused elementwise pass + one reduce per segment ----
        mp_loss = wing_sum(mp_p_ref[...], mp_t_ref[...]) * inv_mp

        fan_p = fan_p_ref[...]            # [B, 136]
        fan_t = fan_t_ref[...]
        fan_loss = wing_sum(fan_p, fan_t) * inv_fan

        iris_loss = wing_sum(iris_p_ref[...], iris_t_ref[...]) * inv_iris

        # ---- expression L2 regularizer (0.1 * mean(expr^2)) ----
        expr = expr_ref[...]
        expr_reg = jnp.sum(expr * expr) * inv_expr

        # ---- eye / lip distance losses via one selection matmul per fan array ----
        dxy = dxy_ref[...]                # [136, 14] constant +/-1 selector
        diff_p = jnp.dot(fan_p, dxy, precision=lax.Precision.HIGHEST,
                         preferred_element_type=jnp.float32)   # [B, 14]
        diff_t = jnp.dot(fan_t, dxy, precision=lax.Precision.HIGHEST,
                         preferred_element_type=jnp.float32)
        dis_p = jnp.sqrt(diff_p[:, :N_PAIR] ** 2 + diff_p[:, N_PAIR:] ** 2)   # [B, 7]
        dis_t = jnp.sqrt(diff_t[:, :N_PAIR] ** 2 + diff_t[:, N_PAIR:] ** 2)
        ad = jnp.abs(dis_p - dis_t)                                           # [B, 7]
        eye_loss = jnp.sum(ad[:, :N_EYE]) * inv_eye
        lip_loss = jnp.sum(ad[:, N_EYE:N_PAIR]) * inv_lip

        out_ref[0, 0] = (mp_loss + fan_loss + iris_loss
                         + expr_reg + eye_loss + lip_loss)

    return kernel


# ----------------------------------------------------------------------------
# Wrapper
# ----------------------------------------------------------------------------
def optimization_loss(mp_lmks, mp_lmks_tgt, fan_lmks, fan_lmks_tgt,
                      seg_mask, seg_mask_tgt, expression_vector,
                      iris_lmks, iris_lmks_tgt):
    # seg_mask / seg_mask_tgt accepted for signature parity; unused in the
    # reference forward (exactly matches the PyTorch module).
    del seg_mask, seg_mask_tgt
    # TODO(synk): the iris_lmks=None branch of the reference (returns a zero
    # iris term) is not implemented; iris landmarks are always provided here.

    assert fan_lmks.shape[-1] == 2, "eye/lip gather assumes 2-D FAN landmarks"

    B = mp_lmks.shape[0]
    mp_n = int(np.prod(mp_lmks.shape[1:]))
    fan_n = int(np.prod(fan_lmks.shape[1:]))
    iris_n = int(np.prod(iris_lmks.shape[1:]))
    expr_n = int(np.prod(expression_vector.shape[1:]))

    f32 = jnp.float32

    def fold(x):
        # Bitcast-free reshape to a fuller-vreg 2-D shape (elementwise use only).
        x = x.astype(f32)
        total = int(np.prod(x.shape))
        cols = x.shape[1]
        return x.reshape(total // cols, cols)

    mp_p = fold(mp_lmks)                  # (3B, 478)
    mp_t = fold(mp_lmks_tgt)
    fan_p = fan_lmks.astype(f32).reshape(B, fan_n)        # (B, 136) — row layout
    fan_t = fan_lmks_tgt.astype(f32).reshape(B, fan_n)    # needed by the selector matmul
    iris_p = iris_lmks.astype(f32).reshape(B, iris_n)     # (B, 20)
    iris_t = iris_lmks_tgt.astype(f32).reshape(B, iris_n)
    expr = expression_vector.astype(f32).reshape(B, expr_n)   # (B, 64)

    dxy = jnp.asarray(_pair_diff_matrix(fan_n))            # (136, 14) compile-time const

    kernel = _make_kernel(B, mp_n, fan_n, iris_n, expr_n)

    wing_elems = B * (mp_n + fan_n + iris_n)
    n_bytes = 4 * (2 * wing_elems + B * expr_n + fan_n * 2 * N_PAIR) + 4
    cost = pl.CostEstimate(
        flops=int(10 * wing_elems + 3 * B * expr_n
                  + 2 * 2 * B * fan_n * 2 * N_PAIR + 20 * B * N_PAIR),
        transcendentals=int(wing_elems + 2 * B * N_PAIR),
        bytes_accessed=int(n_bytes),
    )

    vmem = pl.BlockSpec(memory_space=pltpu.MemorySpace.VMEM)
    out = pl.pallas_call(
        kernel,
        out_shape=jax.ShapeDtypeStruct((1, 1), jnp.float32),
        # Single grid step; all (tiny) operands live in VMEM, scalar out via SMEM.
        in_specs=[vmem] * 8,
        out_specs=pl.BlockSpec(memory_space=pltpu.MemorySpace.SMEM),
        cost_estimate=cost,
    )(mp_p, mp_t, fan_p, fan_t, iris_p, iris_t, expr, dxy)
    return out[0, 0]


# ----------------------------------------------------------------------------
# Pure-JAX reference (mirrors the PyTorch forward) for a correctness check.
# ----------------------------------------------------------------------------
def _reference(mp, mp_t, fan, fan_t, expr, iris, iris_t):
    def wing(p, t):
        d = jnp.abs(p - t)
        return jnp.mean(jnp.where(d < OMEGA, OMEGA * jnp.log1p(d / EPSILON), d - WING_C))

    def dis(x, up_idx, bot_idx):
        up = x[:, list(up_idx), :]
        bot = x[:, list(bot_idx), :]
        return jnp.sqrt(jnp.sum((up - bot) ** 2, axis=-1))

    eye = jnp.mean(jnp.abs(dis(fan, EYE_UP_IDX, EYE_BOT_IDX)
                           - dis(fan_t, EYE_UP_IDX, EYE_BOT_IDX))) * 0.1
    lip = jnp.mean(jnp.abs(dis(fan, LIP_UP_IDX, LIP_BOT_IDX)
                           - dis(fan_t, LIP_UP_IDX, LIP_BOT_IDX))) * 0.1
    return (wing(mp, mp_t) + wing(fan, fan_t) * W_MP + wing(iris, iris_t)
            + jnp.mean(jnp.square(expr)) * 0.1 + eye + lip)


# ----------------------------------------------------------------------------
# Main
# ----------------------------------------------------------------------------
if __name__ == "__main__":
    key = jax.random.PRNGKey(0)
    ks = jax.random.split(key, 9)
    B = 2
    mp_lmks = jax.random.normal(ks[0], (B, 478, 3), jnp.float32)
    mp_lmks_tgt = jax.random.normal(ks[1], (B, 478, 3), jnp.float32)
    fan_lmks = jax.random.normal(ks[2], (B, 68, 2), jnp.float32)
    fan_lmks_tgt = jax.random.normal(ks[3], (B, 68, 2), jnp.float32)
    seg_mask = jax.random.normal(ks[4], (B, 1, 16, 16), jnp.float32)
    seg_mask_tgt = jax.random.normal(ks[5], (B, 1, 16, 16), jnp.float32)
    expression_vector = jax.random.normal(ks[6], (B, 64), jnp.float32)
    iris_lmks = jax.random.normal(ks[7], (B, 10, 2), jnp.float32)
    iris_lmks_tgt = jax.random.normal(ks[8], (B, 10, 2), jnp.float32)

    loss_fn = jax.jit(optimization_loss)   # reshapes become bitcasts; dxy is a baked constant
    out = loss_fn(mp_lmks, mp_lmks_tgt, fan_lmks, fan_lmks_tgt,
                  seg_mask, seg_mask_tgt, expression_vector,
                  iris_lmks, iris_lmks_tgt)
    out = jax.block_until_ready(out)

    ref = _reference(mp_lmks, mp_lmks_tgt, fan_lmks, fan_lmks_tgt,
                     expression_vector, iris_lmks, iris_lmks_tgt)
    np.testing.assert_allclose(np.asarray(out), np.asarray(ref), rtol=1e-5, atol=1e-5)
    print("KERNEL_OK")
</pallas_src>

<mosaic_0001>
module attributes {stable_mosaic.version = 11 : i64} {
  func.func @kernel(%arg0: memref<6x478xf32, #tpu.memory_space<vmem>>, %arg1: memref<6x478xf32, #tpu.memory_space<vmem>>, %arg2: memref<2x136xf32, #tpu.memory_space<vmem>>, %arg3: memref<2x136xf32, #tpu.memory_space<vmem>>, %arg4: memref<2x20xf32, #tpu.memory_space<vmem>>, %arg5: memref<2x20xf32, #tpu.memory_space<vmem>>, %arg6: memref<2x64xf32, #tpu.memory_space<vmem>>, %arg7: memref<136x14xf32, #tpu.memory_space<vmem>>, %arg8: memref<1x1xf32, #tpu.memory_space<smem>>) attributes {dimension_semantics = [], scalar_prefetch = 0 : i64, scratch_operands = 0 : i64, tpu.core_type = #tpu.core_type<tc>} {
    %c0 = arith.constant 0 : index
    %c0_0 = arith.constant 0 : index
    %0 = vector.load %arg0[%c0, %c0_0] : memref<6x478xf32, #tpu.memory_space<vmem>>, vector<6x478xf32>
    %c0_1 = arith.constant 0 : index
    %c0_2 = arith.constant 0 : index
    %1 = vector.load %arg1[%c0_1, %c0_2] : memref<6x478xf32, #tpu.memory_space<vmem>>, vector<6x478xf32>
    %2 = arith.subf %0, %1 : vector<6x478xf32>
    %3 = math.absf %2 : vector<6x478xf32>
    %cst = arith.constant 1.000000e+01 : f32
    %4 = vector.broadcast %cst : f32 to vector<6x478xf32>
    %5 = arith.cmpf olt, %3, %4 : vector<6x478xf32>
    %cst_3 = arith.constant 5.000000e-01 : f32
    %6 = vector.broadcast %cst_3 : f32 to vector<6x478xf32>
    %7 = arith.mulf %3, %6 : vector<6x478xf32>
    %8 = math.log1p %7 : vector<6x478xf32>
    %cst_4 = arith.constant 1.000000e+01 : f32
    %9 = vector.broadcast %cst_4 : f32 to vector<6x478xf32>
    %10 = arith.mulf %9, %8 : vector<6x478xf32>
    %cst_5 = arith.constant -7.9175949 : f32
    %11 = vector.broadcast %cst_5 : f32 to vector<6x478xf32>
    %12 = arith.subf %3, %11 : vector<6x478xf32>
    %13 = arith.select %5, %10, %12 : vector<6x478xi1>, vector<6x478xf32>
    %14 = vector.shape_cast %13 : vector<6x478xf32> to vector<1x6x478xf32>
    %cst_6 = arith.constant dense<0.000000e+00> : vector<1xf32>
    %15 = vector.multi_reduction <add>, %14, %cst_6 [1, 2] : vector<1x6x478xf32> to vector<1xf32>
    %16 = vector.shape_cast %15 : vector<1xf32> to vector<1x1x1xf32>
    %17 = vector.extract %16[0, 0, 0] : f32 from vector<1x1x1xf32>
    %cst_7 = arith.constant 3.48675036E-4 : f32
    %18 = arith.mulf %17, %cst_7 : f32
    %c0_8 = arith.constant 0 : index
    %c0_9 = arith.constant 0 : index
    %19 = vector.load %arg2[%c0_8, %c0_9] : memref<2x136xf32, #tpu.memory_space<vmem>>, vector<2x136xf32>
    %c0_10 = arith.constant 0 : index
    %c0_11 = arith.constant 0 : index
    %20 = vector.load %arg3[%c0_10, %c0_11] : memref<2x136xf32, #tpu.memory_space<vmem>>, vector<2x136xf32>
    %21 = arith.subf %19, %20 : vector<2x136xf32>
    %22 = math.absf %21 : vector<2x136xf32>
    %cst_12 = arith.constant 1.000000e+01 : f32
    %23 = vector.broadcast %cst_12 : f32 to vector<2x136xf32>
    %24 = arith.cmpf olt, %22, %23 : vector<2x136xf32>
    %cst_13 = arith.constant 5.000000e-01 : f32
    %25 = vector.broadcast %cst_13 : f32 to vector<2x136xf32>
    %26 = arith.mulf %22, %25 : vector<2x136xf32>
    %27 = math.log1p %26 : vector<2x136xf32>
    %cst_14 = arith.constant 1.000000e+01 : f32
    %28 = vector.broadcast %cst_14 : f32 to vector<2x136xf32>
    %29 = arith.mulf %28, %27 : vector<2x136xf32>
    %cst_15 = arith.constant -7.9175949 : f32
    %30 = vector.broadcast %cst_15 : f32 to vector<2x136xf32>
    %31 = arith.subf %22, %30 : vector<2x136xf32>
    %32 = arith.select %24, %29, %31 : vector<2x136xi1>, vector<2x136xf32>
    %33 = vector.shape_cast %32 : vector<2x136xf32> to vector<1x2x136xf32>
    %cst_16 = arith.constant dense<0.000000e+00> : vector<1xf32>
    %34 = vector.multi_reduction <add>, %33, %cst_16 [1, 2] : vector<1x2x136xf32> to vector<1xf32>
    %35 = vector.shape_cast %34 : vector<1xf32> to vector<1x1x1xf32>
    %36 = vector.extract %35[0, 0, 0] : f32 from vector<1x1x1xf32>
    %cst_17 = arith.constant 7.35294132E-4 : f32
    %37 = arith.mulf %36, %cst_17 : f32
    %c0_18 = arith.constant 0 : index
    %c0_19 = arith.constant 0 : index
    %38 = vector.load %arg4[%c0_18, %c0_19] : memref<2x20xf32, #tpu.memory_space<vmem>>, vector<2x20xf32>
    %c0_20 = arith.constant 0 : index
    %c0_21 = arith.constant 0 : index
    %39 = vector.load %arg5[%c0_20, %c0_21] : memref<2x20xf32, #tpu.memory_space<vmem>>, vector<2x20xf32>
    %40 = arith.subf %38, %39 : vector<2x20xf32>
    %41 = math.absf %40 : vector<2x20xf32>
    %cst_22 = arith.constant 1.000000e+01 : f32
    %42 = vector.broadcast %cst_22 : f32 to vector<2x20xf32>
    %43 = arith.cmpf olt, %41, %42 : vector<2x20xf32>
    %cst_23 = arith.constant 5.000000e-01 : f32
    %44 = vector.broadcast %cst_23 : f32 to vector<2x20xf32>
    %45 = arith.mulf %41, %44 : vector<2x20xf32>
    %46 = math.log1p %45 : vector<2x20xf32>
    %cst_24 = arith.constant 1.000000e+01 : f32
    %47 = vector.broadcast %cst_24 : f32 to vector<2x20xf32>
    %48 = arith.mulf %47, %46 : vector<2x20xf32>
    %cst_25 = arith.constant -7.9175949 : f32
    %49 = vector.broadcast %cst_25 : f32 to vector<2x20xf32>
    %50 = arith.subf %41, %49 : vector<2x20xf32>
    %51 = arith.select %43, %48, %50 : vector<2x20xi1>, vector<2x20xf32>
    %52 = vector.shape_cast %51 : vector<2x20xf32> to vector<1x2x20xf32>
    %cst_26 = arith.constant dense<0.000000e+00> : vector<1xf32>
    %53 = vector.multi_reduction <add>, %52, %cst_26 [1, 2] : vector<1x2x20xf32> to vector<1xf32>
    %54 = vector.shape_cast %53 : vector<1xf32> to vector<1x1x1xf32>
    %55 = vector.extract %54[0, 0, 0] : f32 from vector<1x1x1xf32>
    %cst_27 = arith.constant 2.500000e-02 : f32
    %56 = arith.mulf %55, %cst_27 : f32
    %c0_28 = arith.constant 0 : index
    %c0_29 = arith.constant 0 : index
    %57 = vector.load %arg6[%c0_28, %c0_29] : memref<2x64xf32, #tpu.memory_space<vmem>>, vector<2x64xf32>
    %58 = arith.mulf %57, %57 : vector<2x64xf32>
    %59 = vector.shape_cast %58 : vector<2x64xf32> to vector<1x2x64xf32>
    %cst_30 = arith.constant dense<0.000000e+00> : vector<1xf32>
    %60 = vector.multi_reduction <add>, %59, %cst_30 [1, 2] : vector<1x2x64xf32> to vector<1xf32>
    %61 = vector.shape_cast %60 : vector<1xf32> to vector<1x1x1xf32>
    %62 = vector.extract %61[0, 0, 0] : f32 from vector<1x1x1xf32>
    %cst_31 = arith.constant 7.812500e-04 : f32
    %63 = arith.mulf %62, %cst_31 : f32
    %c0_32 = arith.constant 0 : index
    %c0_33 = arith.constant 0 : index
    %64 = vector.load %arg7[%c0_32, %c0_33] : memref<136x14xf32, #tpu.memory_space<vmem>>, vector<136x14xf32>
    %cst_34 = arith.constant dense<0.000000e+00> : vector<2x14xf32>
    %65 = tpu.matmul %19, %64, %cst_34 {dimension_numbers = #tpu.dot_dimension_numbers<[1], [0], [0], [1], [0, 0, 1, 1], [], []>, precision = #tpu.contract_precision<fp32>} : vector<2x136xf32>, vector<136x14xf32>, vector<2x14xf32> -> vector<2x14xf32>
    %cst_35 = arith.constant dense<0.000000e+00> : vector<2x14xf32>
    %66 = tpu.matmul %20, %64, %cst_35 {dimension_numbers = #tpu.dot_dimension_numbers<[1], [0], [0], [1], [0, 0, 1, 1], [], []>, precision = #tpu.contract_precision<fp32>} : vector<2x136xf32>, vector<136x14xf32>, vector<2x14xf32> -> vector<2x14xf32>
    %67 = vector.extract_strided_slice %65 {offsets = [0, 0], sizes = [2, 7], strides = [1, 1]} : vector<2x14xf32> to vector<2x7xf32>
    %68 = arith.mulf %67, %67 : vector<2x7xf32>
    %69 = vector.extract_strided_slice %65 {offsets = [0, 7], sizes = [2, 7], strides = [1, 1]} : vector<2x14xf32> to vector<2x7xf32>
    %70 = arith.mulf %69, %69 : vector<2x7xf32>
    %71 = arith.addf %68, %70 : vector<2x7xf32>
    %72 = math.sqrt %71 : vector<2x7xf32>
    %73 = vector.extract_strided_slice %66 {offsets = [0, 0], sizes = [2, 7], strides = [1, 1]} : vector<2x14xf32> to vector<2x7xf32>
    %74 = arith.mulf %73, %73 : vector<2x7xf32>
    %75 = vector.extract_strided_slice %66 {offsets = [0, 7], sizes = [2, 7], strides = [1, 1]} : vector<2x14xf32> to vector<2x7xf32>
    %76 = arith.mulf %75, %75 : vector<2x7xf32>
    %77 = arith.addf %74, %76 : vector<2x7xf32>
    %78 = math.sqrt %77 : vector<2x7xf32>
    %79 = arith.subf %72, %78 : vector<2x7xf32>
    %80 = math.absf %79 : vector<2x7xf32>
    %81 = vector.extract_strided_slice %80 {offsets = [0, 0], sizes = [2, 4], strides = [1, 1]} : vector<2x7xf32> to vector<2x4xf32>
    %82 = vector.shape_cast %81 : vector<2x4xf32> to vector<1x2x4xf32>
    %cst_36 = arith.constant dense<0.000000e+00> : vector<1xf32>
    %83 = vector.multi_reduction <add>, %82, %cst_36 [1, 2] : vector<1x2x4xf32> to vector<1xf32>
    %84 = vector.shape_cast %83 : vector<1xf32> to vector<1x1x1xf32>
    %85 = vector.extract %84[0, 0, 0] : f32 from vector<1x1x1xf32>
    %cst_37 = arith.constant 1.250000e-02 : f32
    %86 = arith.mulf %85, %cst_37 : f32
    %87 = vector.extract_strided_slice %80 {offsets = [0, 4], sizes = [2, 3], strides = [1, 1]} : vector<2x7xf32> to vector<2x3xf32>
    %88 = vector.shape_cast %87 : vector<2x3xf32> to vector<1x2x3xf32>
    %cst_38 = arith.constant dense<0.000000e+00> : vector<1xf32>
    %89 = vector.multi_reduction <add>, %88, %cst_38 [1, 2] : vector<1x2x3xf32> to vector<1xf32>
    %90 = vector.shape_cast %89 : vector<1xf32> to vector<1x1x1xf32>
    %91 = vector.extract %90[0, 0, 0] : f32 from vector<1x1x1xf32>
    %cst_39 = arith.constant 0.0166666675 : f32
    %92 = arith.mulf %91, %cst_39 : f32
    %93 = arith.addf %18, %37 : f32
    %94 = arith.addf %93, %56 : f32
    %95 = arith.addf %94, %63 : f32
    %96 = arith.addf %95, %86 : f32
    %97 = arith.addf %96, %92 : f32
    %c0_40 = arith.constant 0 : index
    %c0_41 = arith.constant 0 : index
    %98 = memref.load %arg8[%c0_40, %c0_41] : memref<1x1xf32, #tpu.memory_space<smem>>
    memref.store %97, %arg8[%c0_40, %c0_41] : memref<1x1xf32, #tpu.memory_space<smem>>
    return
  }
}

</mosaic_0001>

<llo_original>
// kernel: optimization_loss.1
$region0: #{optimization_loss.1}
  #allocation0 [shape = 'u32[]', space=smem, size = 0x4, offset = 0x4, fixed_abs, tag = 'smem constant byte address 0x4 - core index']
  #allocation1 [shape = 'u32[72,128]{1,0:T(1,128)}', space=vmem, size = 0x9000, scoped, tag = 'internal scratch']
  %s0 = inlined_call_operand.vmem [shape: f32[6,478], index: 0, kind: input, shape index: {}]
  %s1 = inlined_call_operand.vmem [shape: f32[6,478], index: 1, kind: input, shape index: {}]
  %s2 = inlined_call_operand.vmem [shape: f32[2,136], index: 2, kind: input, shape index: {}]
  %s3 = inlined_call_operand.vmem [shape: f32[2,136], index: 3, kind: input, shape index: {}]
  %s4 = inlined_call_operand.vmem [shape: f32[2,20], index: 4, kind: input, shape index: {}]
  %s5 = inlined_call_operand.vmem [shape: f32[2,20], index: 5, kind: input, shape index: {}]
  %s6 = inlined_call_operand.vmem [shape: f32[2,64], index: 6, kind: input, shape index: {}]
  %s7 = inlined_call_operand.vmem [shape: f32[136,14], index: 7, kind: input, shape index: {}]
  %s8 = inlined_call_operand.hbm [shape: f32[1,1], index: 8, kind: output, shape index: {}]
  %s9 = sld [smem:[#allocation0]]
  $region42: #{optimization_loss.1} parent=0
    _
  %s11 = ssub.s32 1, %s9
  %s12 = scalar_select 0, %s11, %s9
  $region1: #{optimization_loss.1} parent=0
    #allocation2 [shape = 'u8[512]{0}', space=smem, size = 0x200, scoped, tag = 'output window, operand 0, single buffered']
    #allocation3 [shape = 's32[1]{0}', space=sflag, size = 0x4, scoped, tag = 'scoped memory for optimization_loss.1']
    %13 = vsyncpa [#allocation3], 0
    // Predicated region
    $region2: #{optimization_loss.1} parent=1 // pred_check
      _
    $region3: #{optimization_loss.1} parent=1 // pred_check_branch
      %15 = sbr.rel (0) target = $region5
    $region4: #{optimization_loss.1} parent=1 // pred_region
      _
    $region5: #{optimization_loss.1} parent=1 // pred_fallthru
      _
    // Predicated region
    $region6: #{optimization_loss.1} parent=1 // pred_check
      _
    $region7: #{optimization_loss.1} parent=1 // pred_check_branch
      %17 = sbr.rel (0) target = $region9
    $region8: #{optimization_loss.1} parent=1 // pred_region
      _
    $region9: #{optimization_loss.1} parent=1 // pred_fallthru
      _
    // Predicated region
    $region10: #{optimization_loss.1} parent=1 // pred_check
      _
    $region11: #{optimization_loss.1} parent=1 // pred_check_branch
      %19 = sbr.rel (0) target = $region13
    $region12: #{optimization_loss.1} parent=1 // pred_region
      _
    $region13: #{optimization_loss.1} parent=1 // pred_fallthru
      _
    // Predicated region
    $region14: #{optimization_loss.1} parent=1 // pred_check
      _
    $region15: #{optimization_loss.1} parent=1 // pred_check_branch
      %21 = sbr.rel (0) target = $region17
    $region16: #{optimization_loss.1} parent=1 // pred_region
      _
    $region17: #{optimization_loss.1} parent=1 // pred_fallthru
      _
    // Predicated region
    $region18: #{optimization_loss.1} parent=1 // pred_check
      _
    $region19: #{optimization_loss.1} parent=1 // pred_check_branch
      %23 = sbr.rel (0) target = $region21
    $region20: #{optimization_loss.1} parent=1 // pred_region
      _
    $region21: #{optimization_loss.1} parent=1 // pred_fallthru
      _
    // Predicated region
    $region22: #{optimization_loss.1} parent=1 // pred_check
      _
    $region23: #{optimization_loss.1} parent=1 // pred_check_branch
      %25 = sbr.rel (0) target = $region25
    $region24: #{optimization_loss.1} parent=1 // pred_region
      _
    $region25: #{optimization_loss.1} parent=1 // pred_fallthru
      _
    // Predicated region
    $region26: #{optimization_loss.1} parent=1 // pred_check
      _
    $region27: #{optimization_loss.1} parent=1 // pred_check_branch
      %27 = sbr.rel (0) target = $region29
    $region28: #{optimization_loss.1} parent=1 // pred_region
      _
    $region29: #{optimization_loss.1} parent=1 // pred_fallthru
      _
    // Predicated region
    $region30: #{optimization_loss.1} parent=1 // pred_check
      _
    $region31: #{optimization_loss.1} parent=1 // pred_check_branch
      %29 = sbr.rel (0) target = $region33
    $region32: #{optimization_loss.1} parent=1 // pred_region
      _
    $region33: #{optimization_loss.1} parent=1 // pred_fallthru
      _
    %v30 = vld [vmem:[%s0] sm:$0x3f]
    %v31 = vld [vmem:[%s0 + $0x8] sm:$0x3f]
    %v32 = vld [vmem:[%s0 + $0x10] sm:$0x3f]
    %v33 = vld [vmem:[%s0 + $0x18] sm:$0x3f]
    %v34 = vld [vmem:[%s1] sm:$0x3f]
    %v35 = vld [vmem:[%s1 + $0x8] sm:$0x3f]
    %v36 = vld [vmem:[%s1 + $0x10] sm:$0x3f]
    %v37 = vld [vmem:[%s1 + $0x18] sm:$0x3f]
    %v38 = vsub.f32 %v30, %v34
    %v39 = vsub.f32 %v31, %v35
    %v40 = vsub.f32 %v32, %v36
    %v41 = vsub.f32 %v33, %v37
    %v42 = vand.u32 2147483647, %v38
    %v43 = vand.u32 2147483647, %v39
    %v44 = vand.u32 2147483647, %v40
    %v45 = vand.u32 2147483647, %v41
    %vm46 = vcmp.lt.f32.partialorder %v42, 10.0
    %vm47 = vcmp.lt.f32.partialorder %v43, 10.0
    %vm48 = vcmp.lt.f32.partialorder %v44, 10.0
    %vm49 = vcmp.lt.f32.partialorder %v45, 10.0
    %v50 = vmul.f32 %v42, 0.5
    %v51 = vmul.f32 %v43, 0.5
    %v52 = vmul.f32 %v44, 0.5
    %v53 = vmul.f32 %v45, 0.5
    %v54 = vadd.f32 %v50, 1.0
    %v55 = vlog2.pop %v54
    %v56 = vmul.f32 %v55, 0.6931472
    %v57 = vmul.f32 -0.5, %v50
    %v58 = vadd.f32 %v57, 1.0
    %v59 = vmul.f32 %v58, %v50
    %v60 = vand.u32 2147483647, %v50
    %vm61 = vcmp.lt.f32.partialorder %v60, 0.0004427343
    %v62 = vsel %vm61, %v59, %v56
    %v63 = vadd.f32 %v51, 1.0
    %v64 = vlog2.pop %v63
    %v65 = vmul.f32 %v64, 0.6931472
    %v66 = vmul.f32 -0.5, %v51
    %v67 = vadd.f32 %v66, 1.0
    %v68 = vmul.f32 %v67, %v51
    %v69 = vand.u32 2147483647, %v51
    %vm70 = vcmp.lt.f32.partialorder %v69, 0.0004427343
    %v71 = vsel %vm70, %v68, %v65
    %v72 = vadd.f32 %v52, 1.0
    %v73 = vlog2.pop %v72
    %v74 = vmul.f32 %v73, 0.6931472
    %v75 = vmul.f32 -0.5, %v52
    %v76 = vadd.f32 %v75, 1.0
    %v77 = vmul.f32 %v76, %v52
    %v78 = vand.u32 2147483647, %v52
    %vm79 = vcmp.lt.f32.partialorder %v78, 0.0004427343
    %v80 = vsel %vm79, %v77, %v74
    %v81 = vadd.f32 %v53, 1.0
    %v82 = vlog2.pop %v81
    %v83 = vmul.f32 %v82, 0.6931472
    %v84 = vmul.f32 -0.5, %v53
    %v85 = vadd.f32 %v84, 1.0
    %v86 = vmul.f32 %v85, %v53
    %v87 = vand.u32 2147483647, %v53
    %vm88 = vcmp.lt.f32.partialorder %v87, 0.0004427343
    %v89 = vsel %vm88, %v86, %v83
    %v90 = vmul.f32 %v62, 10.0
    %v91 = vmul.f32 %v71, 10.0
    %v92 = vmul.f32 %v80, 10.0
    %v93 = vmul.f32 %v89, 10.0
    %v94 = vsub.f32 %v42, -7.917595
    %v95 = vsub.f32 %v43, -7.917595
    %v96 = vsub.f32 %v44, -7.917595
    %v97 = vsub.f32 %v45, -7.917595
    %v98 = vsel %vm46, %v90, %v94
    %v99 = vsel %vm47, %v91, %v95
    %v100 = vsel %vm48, %v92, %v96
    %v101 = vsel %vm49, %v93, %v97
    %vm102 = vcmask 1045504
    %v103 = vsel %vm102, %v98, 0.0
    %v104 = vsel %vm102, %v99, 0.0
    %v105 = vadd.f32 %v103, %v104
    %v106 = vsel %vm102, %v100, 0.0
    %v107 = vadd.f32 %v105, %v106
    %vm108 = vcmask 766976
    %v109 = vsel %vm108, %v101, 0.0
    %v110 = vadd.f32 %v107, %v109
    %111 = vadd.xlane.f32.xlu0 %v110
    %v112 = vpop.xlane.xlu0 %111
    %v113 = vrot.slane %v112, 4
    %v114 = vadd.f32 %v112, %v113
    %v115 = vrot.slane %v114, 2
    %v116 = vadd.f32 %v114, %v115
    %v117 = vrot.slane %v116, 1
    %v118 = vadd.f32 %v116, %v117
    %s119 = vtos %v118
    %s120 = smul.f32 %s119, 0.00034867504
    %v121 = vld [vmem:[%s2] sm:$0xf]
    %v122 = vld [vmem:[%s3] sm:$0xf]
    %v123 = vsub.f32 %v121, %v122
    %v124 = vand.u32 2147483647, %v123
    %vm125 = vcmp.lt.f32.partialorder %v124, 10.0
    %v126 = vmul.f32 %v124, 0.5
    %v127 = vadd.f32 %v126, 1.0
    %v128 = vlog2.pop %v127
    %v129 = vmul.f32 %v128, 0.6931472
    %v130 = vmul.f32 -0.5, %v126
    %v131 = vadd.f32 %v130, 1.0
    %v132 = vmul.f32 %v131, %v126
    %v133 = vand.u32 2147483647, %v126
    %vm134 = vcmp.lt.f32.partialorder %v133, 0.0004427343
    %v135 = vsel %vm134, %v132, %v129
    %v136 = vmul.f32 %v135, 10.0
    %v137 = vsub.f32 %v124, -7.917595
    %v138 = vsel %vm125, %v136, %v137
    %140 = vst [vmem:[#allocation1] ss:$4 sm:$0xff] %v138
    %v141 = vld.sshfl [vmem:[#allocation1] sm:$0xff pattern:$0x73625140]
    %v142 = vld.sshfl [vmem:[#allocation1 + $0x8] sm:$0xff pattern:$0x73625140]
    %vm145 = vcmask 1041408
    %v146 = vsel %vm145, %v141, 0.0
    %vm147 = vcmask 58368
    %v148 = vsel %vm147, %v142, 0.0
    %v149 = vadd.f32 %v146, %v148
    %150 = vadd.xlane.f32.xlu0 %v149
    %v151 = vpop.xlane.xlu0 %150
    %v152 = vrot.slane %v151, 4
    %v153 = vadd.f32 %v151, %v152
    %v154 = vrot.slane %v153, 2
    %v155 = vadd.f32 %v153, %v154
    %v156 = vrot.slane %v155, 1
    %v157 = vadd.f32 %v155, %v156
    %s158 = vtos %v157
    %s159 = smul.f32 %s158, 0.00073529413
    %v160 = vld [vmem:[%s4] sm:$0x3]
    %v161 = vld [vmem:[%s5] sm:$0x3]
    %v162 = vsub.f32 %v160, %v161
    %v163 = vand.u32 2147483647, %v162
    %vm164 = vcmp.lt.f32.partialorder %v163, 10.0
    %v165 = vmul.f32 %v163, 0.5
    %v166 = vadd.f32 %v165, 1.0
    %v167 = vlog2.pop %v166
    %v168 = vmul.f32 %v167, 0.6931472
    %v169 = vmul.f32 -0.5, %v165
    %v170 = vadd.f32 %v169, 1.0
    %v171 = vmul.f32 %v170, %v165
    %v172 = vand.u32 2147483647, %v165
    %vm173 = vcmp.lt.f32.partialorder %v172, 0.0004427343
    %v174 = vsel %vm173, %v171, %v168
    %v175 = vmul.f32 %v174, 10.0
    %v176 = vsub.f32 %v163, -7.917595
    %v177 = vsel %vm164, %v175, %v176
    %vm178 = vcmask 156672
    %v179 = vsel %vm178, %v177, 0.0
    %180 = vadd.xlane.f32.xlu0 %v179
    %v181 = vpop.xlane.xlu0 %180
    %v182 = vrot.slane %v181, 4
    %v183 = vadd.f32 %v181, %v182
    %v184 = vrot.slane %v183, 2
    %v185 = vadd.f32 %v183, %v184
    %v186 = vrot.slane %v185, 1
    %v187 = vadd.f32 %v185, %v186
    %s188 = vtos %v187
    %s189 = smul.f32 %s188, 0.025
    %v190 = vld [vmem:[%s6] sm:$0x3]
    %v191 = vmul.f32 %v190, %v190
    %vm192 = vcmask 517120
    %v193 = vsel %vm192, %v191, 0.0
    %194 = vadd.xlane.f32.xlu0 %v193
    %v195 = vpop.xlane.xlu0 %194
    %v196 = vrot.slane %v195, 4
    %v197 = vadd.f32 %v195, %v196
    %v198 = vrot.slane %v197, 2
    %v199 = vadd.f32 %v197, %v198
    %v200 = vrot.slane %v199, 1
    %v201 = vadd.f32 %v199, %v200
    %s202 = vtos %v201
    %s203 = smul.f32 %s202, 0.00078125
    %v204 = vld [vmem:[%s7] sm:$0xff]
    %v205 = vld [vmem:[%s7 + $0x8] sm:$0xff]
    %v206 = vld [vmem:[%s7 + $0x10] sm:$0xff]
    %v207 = vld [vmem:[%s7 + $0x18] sm:$0xff]
    %v208 = vld [vmem:[%s7 + $0x20] sm:$0xff]
    %v209 = vld [vmem:[%s7 + $0x28] sm:$0xff]
    %v210 = vld [vmem:[%s7 + $0x30] sm:$0xff]
    %v211 = vld [vmem:[%s7 + $0x38] sm:$0xff]
    %v212 = vld [vmem:[%s7 + $0x40] sm:$0xff]
    %v213 = vld [vmem:[%s7 + $0x48] sm:$0xff]
    %v214 = vld [vmem:[%s7 + $0x50] sm:$0xff]
    %v215 = vld [vmem:[%s7 + $0x58] sm:$0xff]
    %v216 = vld [vmem:[%s7 + $0x60] sm:$0xff]
    %v217 = vld [vmem:[%s7 + $0x68] sm:$0xff]
    %v218 = vld [vmem:[%s7 + $0x70] sm:$0xff]
    %v219 = vld [vmem:[%s7 + $0x78] sm:$0xff]
    %v220 = vld [vmem:[%s7 + $0x80] sm:$0xff]
    %222 = vst [vmem:[#allocation1] ss:$4 sm:$0xff] %v121
    %v223 = vld.sshfl [vmem:[#allocation1] sm:$0xff pattern:$0x73625140]
    %v224 = vld.sshfl [vmem:[#allocation1 + $0x8] sm:$0xff pattern:$0x73625140]
    %vm226 = vcmask 64512
    %v227 = vsel %vm226, %v224, 0
    %v229 = vand.u32 %v219, 4294901760
    %230 = vmatpush.msra.mxu0 %v229
    %v231 = vand.u32 %v218, 4294901760
    %232 = vmatpush.msra.mxu0 %v231
    %v233 = vand.u32 %v217, 4294901760
    %234 = vmatpush.msra.mxu0 %v233
    %v235 = vand.u32 %v216, 4294901760
    %236 = vmatpush.msra.mxu0 %v235
    %v237 = vand.u32 %v215, 4294901760
    %238 = vmatpush.msra.mxu0 %v237
    %v239 = vand.u32 %v214, 4294901760
    %240 = vmatpush.msra.mxu0 %v239
    %v241 = vand.u32 %v213, 4294901760
    %242 = vmatpush.msra.mxu0 %v241
    %v243 = vand.u32 %v212, 4294901760
    %244 = vmatpush.msra.mxu0 %v243
    %v245 = vand.u32 %v211, 4294901760
    %246 = vmatpush.msra.mxu0 %v245
    %v247 = vand.u32 %v210, 4294901760
    %248 = vmatpush.msra.mxu0 %v247
    %v249 = vand.u32 %v209, 4294901760
    %250 = vmatpush.msra.mxu0 %v249
    %v251 = vand.u32 %v208, 4294901760
    %252 = vmatpush.msra.mxu0 %v251
    %v253 = vand.u32 %v207, 4294901760
    %254 = vmatpush.msra.mxu0 %v253
    %v255 = vand.u32 %v206, 4294901760
    %256 = vmatpush.msra.mxu0 %v255
    %v257 = vand.u32 %v205, 4294901760
    %258 = vmatpush.msra.mxu0 %v257
    %v259 = vand.u32 %v204, 4294901760
    %260 = vmatpush.msra.mxu0 %v259
    %v261 = vand.u32 %v223, 4294901760
    %v262 = vsub.f32 %v223, %v261
    %v263 = vand.u32 %v262, 4294901760
    %v264 = vsub.f32 %v262, %v263
    %v265 = vand.u32 %v264, 4294901760
    %266 = vmatmul.f32.gmra.mxu0 %v265
    %v267 = vpop.f32.mrf.mxu0
    %v268 = vadd.f32 0.0, %v267
    %269 = vdwg.mxu0
    %v270 = vand.u32 %v219, 4294901760
    %v271 = vsub.f32 %v219, %v270
    %v272 = vand.u32 %v271, 4294901760
    %v273 = vsub.f32 %v271, %v272
    %v274 = vand.u32 %v273, 4294901760
    %275 = vmatpush.msra.mxu0 %v274
    %v276 = vand.u32 %v218, 4294901760
    %v277 = vsub.f32 %v218, %v276
    %v278 = vand.u32 %v277, 4294901760
    %v279 = vsub.f32 %v277, %v278
    %v280 = vand.u32 %v279, 4294901760
    %281 = vmatpush.msra.mxu0 %v280
    %v282 = vand.u32 %v217, 4294901760
    %v283 = vsub.f32 %v217, %v282
    %v284 = vand.u32 %v283, 4294901760
    %v285 = vsub.f32 %v283, %v284
    %v286 = vand.u32 %v285, 4294901760
    %287 = vmatpush.msra.mxu0 %v286
    %v288 = vand.u32 %v216, 4294901760
    %v289 = vsub.f32 %v216, %v288
    %v290 = vand.u32 %v289, 4294901760
    %v291 = vsub.f32 %v289, %v290
    %v292 = vand.u32 %v291, 4294901760
    %293 = vmatpush.msra.mxu0 %v292
    %v294 = vand.u32 %v215, 4294901760
    %v295 = vsub.f32 %v215, %v294
    %v296 = vand.u32 %v295, 4294901760
    %v297 = vsub.f32 %v295, %v296
    %v298 = vand.u32 %v297, 4294901760
    %299 = vmatpush.msra.mxu0 %v298
    %v300 = vand.u32 %v214, 4294901760
    %v301 = vsub.f32 %v214, %v300
    %v302 = vand.u32 %v301, 4294901760
    %v303 = vsub.f32 %v301, %v302
    %v304 = vand.u32 %v303, 4294901760
    %305 = vmatpush.msra.mxu0 %v304
    %v306 = vand.u32 %v213, 4294901760
    %v307 = vsub.f32 %v213, %v306
    %v308 = vand.u32 %v307, 4294901760
    %v309 = vsub.f32 %v307, %v308
    %v310 = vand.u32 %v309, 4294901760
    %311 = vmatpush.msra.mxu0 %v310
    %v312 = vand.u32 %v212, 4294901760
    %v313 = vsub.f32 %v212, %v312
    %v314 = vand.u32 %v313, 4294901760
    %v315 = vsub.f32 %v313, %v314
    %v316 = vand.u32 %v315, 4294901760
    %317 = vmatpush.msra.mxu0 %v316
    %v318 = vand.u32 %v211, 4294901760
    %v319 = vsub.f32 %v211, %v318
    %v320 = vand.u32 %v319, 4294901760
    %v321 = vsub.f32 %v319, %v320
    %v322 = vand.u32 %v321, 4294901760
    %323 = vmatpush.msra.mxu0 %v322
    %v324 = vand.u32 %v210, 4294901760
    %v325 = vsub.f32 %v210, %v324
    %v326 = vand.u32 %v325, 4294901760
    %v327 = vsub.f32 %v325, %v326
    %v328 = vand.u32 %v327, 4294901760
    %329 = vmatpush.msra.mxu0 %v328
    %v330 = vand.u32 %v209, 4294901760
    %v331 = vsub.f32 %v209, %v330
    %v332 = vand.u32 %v331, 4294901760
    %v333 = vsub.f32 %v331, %v332
    %v334 = vand.u32 %v333, 4294901760
    %335 = vmatpush.msra.mxu0 %v334
    %v336 = vand.u32 %v208, 4294901760
    %v337 = vsub.f32 %v208, %v336
    %v338 = vand.u32 %v337, 4294901760
    %v339 = vsub.f32 %v337, %v338
    %v340 = vand.u32 %v339, 4294901760
    %341 = vmatpush.msra.mxu0 %v340
    %v342 = vand.u32 %v207, 4294901760
    %v343 = vsub.f32 %v207, %v342
    %v344 = vand.u32 %v343, 4294901760
    %v345 = vsub.f32 %v343, %v344
    %v346 = vand.u32 %v345, 4294901760
    %347 = vmatpush.msra.mxu0 %v346
    %v348 = vand.u32 %v206, 4294901760
    %v349 = vsub.f32 %v206, %v348
    %v350 = vand.u32 %v349, 4294901760
    %v351 = vsub.f32 %v349, %v350
    %v352 = vand.u32 %v351, 4294901760
    %353 = vmatpush.msra.mxu0 %v352
    %v354 = vand.u32 %v205, 4294901760
    %v355 = vsub.f32 %v205, %v354
    %v356 = vand.u32 %v355, 4294901760
    %v357 = vsub.f32 %v355, %v356
    %v358 = vand.u32 %v357, 4294901760
    %359 = vmatpush.msra.mxu0 %v358
    %v360 = vand.u32 %v204, 4294901760
    %v361 = vsub.f32 %v204, %v360
    %v362 = vand.u32 %v361, 4294901760
    %v363 = vsub.f32 %v361, %v362
    %v364 = vand.u32 %v363, 4294901760
    %365 = vmatpush.msra.mxu0 %v364
    %v366 = vand.u32 %v223, 4294901760
    %367 = vmatmul.f32.gmra.mxu0 %v366
    %v368 = vpop.f32.mrf.mxu0
    %v369 = vadd.f32 %v268, %v368
    %370 = vdwg.mxu0
    %v371 = vand.u32 %v219, 4294901760
    %v372 = vsub.f32 %v219, %v371
    %373 = vmatpush.msra.mxu0 %v372
    %v374 = vand.u32 %v218, 4294901760
    %v375 = vsub.f32 %v218, %v374
    %376 = vmatpush.msra.mxu0 %v375
    %v377 = vand.u32 %v217, 4294901760
    %v378 = vsub.f32 %v217, %v377
    %379 = vmatpush.msra.mxu0 %v378
    %v380 = vand.u32 %v216, 4294901760
    %v381 = vsub.f32 %v216, %v380
    %382 = vmatpush.msra.mxu0 %v381
    %v383 = vand.u32 %v215, 4294901760
    %v384 = vsub.f32 %v215, %v383
    %385 = vmatpush.msra.mxu0 %v384
    %v386 = vand.u32 %v214, 4294901760
    %v387 = vsub.f32 %v214, %v386
    %388 = vmatpush.msra.mxu0 %v387
    %v389 = vand.u32 %v213, 4294901760
    %v390 = vsub.f32 %v213, %v389
    %391 = vmatpush.msra.mxu0 %v390
    %v392 = vand.u32 %v212, 4294901760
    %v393 = vsub.f32 %v212, %v392
    %394 = vmatpush.msra.mxu0 %v393
    %v395 = vand.u32 %v211, 4294901760
    %v396 = vsub.f32 %v211, %v395
    %397 = vmatpush.msra.mxu0 %v396
    %v398 = vand.u32 %v210, 4294901760
    %v399 = vsub.f32 %v210, %v398
    %400 = vmatpush.msra.mxu0 %v399
    %v401 = vand.u32 %v209, 4294901760
    %v402 = vsub.f32 %v209, %v401
    %403 = vmatpush.msra.mxu0 %v402
    %v404 = vand.u32 %v208, 4294901760
    %v405 = vsub.f32 %v208, %v404
    %406 = vmatpush.msra.mxu0 %v405
    %v407 = vand.u32 %v207, 4294901760
    %v408 = vsub.f32 %v207, %v407
    %409 = vmatpush.msra.mxu0 %v408
    %v410 = vand.u32 %v206, 4294901760
    %v411 = vsub.f32 %v206, %v410
    %412 = vmatpush.msra.mxu0 %v411
    %v413 = vand.u32 %v205, 4294901760
    %v414 = vsub.f32 %v205, %v413
    %415 = vmatpush.msra.mxu0 %v414
    %v416 = vand.u32 %v204, 4294901760
    %v417 = vsub.f32 %v204, %v416
    %418 = vmatpush.msra.mxu0 %v417
    %v419 = vand.u32 %v223, 4294901760
    %v420 = vsub.f32 %v223, %v419
    %421 = vmatmul.f32.gmra.mxu0 %v420
    %v422 = vpop.f32.mrf.mxu0
    %v423 = vadd.f32 %v369, %v422
    %424 = vdwg.mxu0
    %v425 = vand.u32 %v219, 4294901760
    %426 = vmatpush.msra.mxu0 %v425
    %v427 = vand.u32 %v218, 4294901760
    %428 = vmatpush.msra.mxu0 %v427
    %v429 = vand.u32 %v217, 4294901760
    %430 = vmatpush.msra.mxu0 %v429
    %v431 = vand.u32 %v216, 4294901760
    %432 = vmatpush.msra.mxu0 %v431
    %v433 = vand.u32 %v215, 4294901760
    %434 = vmatpush.msra.mxu0 %v433
    %v435 = vand.u32 %v214, 4294901760
    %436 = vmatpush.msra.mxu0 %v435
    %v437 = vand.u32 %v213, 4294901760
    %438 = vmatpush.msra.mxu0 %v437
    %v439 = vand.u32 %v212, 4294901760
    %440 = vmatpush.msra.mxu0 %v439
    %v441 = vand.u32 %v211, 4294901760
    %442 = vmatpush.msra.mxu0 %v441
    %v443 = vand.u32 %v210, 4294901760
    %444 = vmatpush.msra.mxu0 %v443
    %v445 = vand.u32 %v209, 4294901760
    %446 = vmatpush.msra.mxu0 %v445
    %v447 = vand.u32 %v208, 4294901760
    %448 = vmatpush.msra.mxu0 %v447
    %v449 = vand.u32 %v207, 4294901760
    %450 = vmatpush.msra.mxu0 %v449
    %v451 = vand.u32 %v206, 4294901760
    %452 = vmatpush.msra.mxu0 %v451
    %v453 = vand.u32 %v205, 4294901760
    %454 = vmatpush.msra.mxu0 %v453
    %v455 = vand.u32 %v204, 4294901760
    %456 = vmatpush.msra.mxu0 %v455
    %v457 = vand.u32 %v223, 4294901760
    %v458 = vsub.f32 %v223, %v457
    %v459 = vand.u32 %v458, 4294901760
    %460 = vmatmul.f32.gmra.mxu0 %v459
    %v461 = vpop.f32.mrf.mxu0
    %v462 = vadd.f32 %v423, %v461
    %463 = vdwg.mxu0
    %v464 = vand.u32 %v219, 4294901760
    %v465 = vsub.f32 %v219, %v464
    %v466 = vand.u32 %v465, 4294901760
    %467 = vmatpush.msra.mxu0 %v466
    %v468 = vand.u32 %v218, 4294901760
    %v469 = vsub.f32 %v218, %v468
    %v470 = vand.u32 %v469, 4294901760
    %471 = vmatpush.msra.mxu0 %v470
    %v472 = vand.u32 %v217, 4294901760
    %v473 = vsub.f32 %v217, %v472
    %v474 = vand.u32 %v473, 4294901760
    %475 = vmatpush.msra.mxu0 %v474
    %v476 = vand.u32 %v216, 4294901760
    %v477 = vsub.f32 %v216, %v476
    %v478 = vand.u32 %v477, 4294901760
    %479 = vmatpush.msra.mxu0 %v478
    %v480 = vand.u32 %v215, 4294901760
    %v481 = vsub.f32 %v215, %v480
    %v482 = vand.u32 %v481, 4294901760
    %483 = vmatpush.msra.mxu0 %v482
    %v484 = vand.u32 %v214, 4294901760
    %v485 = vsub.f32 %v214, %v484
    %v486 = vand.u32 %v485, 4294901760
    %487 = vmatpush.msra.mxu0 %v486
    %v488 = vand.u32 %v213, 4294901760
    %v489 = vsub.f32 %v213, %v488
    %v490 = vand.u32 %v489, 4294901760
    %491 = vmatpush.msra.mxu0 %v490
    %v492 = vand.u32 %v212, 4294901760
    %v493 = vsub.f32 %v212, %v492
    %v494 = vand.u32 %v493, 4294901760
    %495 = vmatpush.msra.mxu0 %v494
    %v496 = vand.u32 %v211, 4294901760
    %v497 = vsub.f32 %v211, %v496
    %v498 = vand.u32 %v497, 4294901760
    %499 = vmatpush.msra.mxu0 %v498
    %v500 = vand.u32 %v210, 4294901760
    %v501 = vsub.f32 %v210, %v500
    %v502 = vand.u32 %v501, 4294901760
    %503 = vmatpush.msra.mxu0 %v502
    %v504 = vand.u32 %v209, 4294901760
    %v505 = vsub.f32 %v209, %v504
    %v506 = vand.u32 %v505, 4294901760
    %507 = vmatpush.msra.mxu0 %v506
    %v508 = vand.u32 %v208, 4294901760
    %v509 = vsub.f32 %v208, %v508
    %v510 = vand.u32 %v509, 4294901760
    %511 = vmatpush.msra.mxu0 %v510
    %v512 = vand.u32 %v207, 4294901760
    %v513 = vsub.f32 %v207, %v512
    %v514 = vand.u32 %v513, 4294901760
    %515 = vmatpush.msra.mxu0 %v514
    %v516 = vand.u32 %v206, 4294901760
    %v517 = vsub.f32 %v206, %v516
    %v518 = vand.u32 %v517, 4294901760
    %519 = vmatpush.msra.mxu0 %v518
    %v520 = vand.u32 %v205, 4294901760
    %v521 = vsub.f32 %v205, %v520
    %v522 = vand.u32 %v521, 4294901760
    %523 = vmatpush.msra.mxu0 %v522
    %v524 = vand.u32 %v204, 4294901760
    %v525 = vsub.f32 %v204, %v524
    %v526 = vand.u32 %v525, 4294901760
    %527 = vmatpush.msra.mxu0 %v526
    %v528 = vand.u32 %v223, 4294901760
    %529 = vmatmul.f32.gmra.mxu0 %v528
    %v530 = vpop.f32.mrf.mxu0
    %v531 = vadd.f32 %v462, %v530
    %532 = vdwg.mxu0
    %v533 = vand.u32 %v219, 4294901760
    %534 = vmatpush.msra.mxu0 %v533
    %v535 = vand.u32 %v218, 4294901760
    %536 = vmatpush.msra.mxu0 %v535
    %v537 = vand.u32 %v217, 4294901760
    %538 = vmatpush.msra.mxu0 %v537
    %v539 = vand.u32 %v216, 4294901760
    %540 = vmatpush.msra.mxu0 %v539
    %v541 = vand.u32 %v215, 4294901760
    %542 = vmatpush.msra.mxu0 %v541
    %v543 = vand.u32 %v214, 4294901760
    %544 = vmatpush.msra.mxu0 %v543
    %v545 = vand.u32 %v213, 4294901760
    %546 = vmatpush.msra.mxu0 %v545
    %v547 = vand.u32 %v212, 4294901760
    %548 = vmatpush.msra.mxu0 %v547
    %v549 = vand.u32 %v211, 4294901760
    %550 = vmatpush.msra.mxu0 %v549
    %v551 = vand.u32 %v210, 4294901760
    %552 = vmatpush.msra.mxu0 %v551
    %v553 = vand.u32 %v209, 4294901760
    %554 = vmatpush.msra.mxu0 %v553
    %v555 = vand.u32 %v208, 4294901760
    %556 = vmatpush.msra.mxu0 %v555
    %v557 = vand.u32 %v207, 4294901760
    %558 = vmatpush.msra.mxu0 %v557
    %v559 = vand.u32 %v206, 4294901760
    %560 = vmatpush.msra.mxu0 %v559
    %v561 = vand.u32 %v205, 4294901760
    %562 = vmatpush.msra.mxu0 %v561
    %v563 = vand.u32 %v204, 4294901760
    %564 = vmatpush.msra.mxu0 %v563
    %v565 = vand.u32 %v223, 4294901760
    %566 = vmatmul.f32.gmra.mxu0 %v565
    %v567 = vpop.f32.mrf.mxu0
    %v568 = vadd.f32 %v531, %v567
    %569 = vdwg.mxu0
    %570 = vmatpush.msra.mxu0 0.0
    %571 = vmatpush.msra.mxu0 0.0
    %572 = vmatpush.msra.mxu0 0.0
    %573 = vmatpush.msra.mxu0 0.0
    %574 = vmatpush.msra.mxu0 0.0
    %575 = vmatpush.msra.mxu0 0.0
    %576 = vmatpush.msra.mxu0 0.0
    %577 = vmatpush.msra.mxu0 0.0
    %578 = vmatpush.msra.mxu0 0.0
    %579 = vmatpush.msra.mxu0 0.0
    %580 = vmatpush.msra.mxu0 0.0
    %581 = vmatpush.msra.mxu0 0.0
    %582 = vmatpush.msra.mxu0 0.0
    %583 = vmatpush.msra.mxu0 0.0
    %584 = vmatpush.msra.mxu0 0.0
    %v585 = vand.u32 %v220, 4294901760
    %586 = vmatpush.msra.mxu0 %v585
    %v587 = vand.u32 %v227, 4294901760
    %v588 = vsub.f32 %v227, %v587
    %v589 = vand.u32 %v588, 4294901760
    %v590 = vsub.f32 %v588, %v589
    %v591 = vand.u32 %v590, 4294901760
    %592 = vmatmul.f32.gmra.mxu0 %v591
    %v593 = vpop.f32.mrf.mxu0
    %v594 = vadd.f32 %v568, %v593
    %595 = vdwg.mxu0
    %596 = vmatpush.msra.mxu0 0.0
    %597 = vmatpush.msra.mxu0 0.0
    %598 = vmatpush.msra.mxu0 0.0
    %599 = vmatpush.msra.mxu0 0.0
    %600 = vmatpush.msra.mxu0 0.0
    %601 = vmatpush.msra.mxu0 0.0
    %602 = vmatpush.msra.mxu0 0.0
    %603 = vmatpush.msra.mxu0 0.0
    %604 = vmatpush.msra.mxu0 0.0
    %605 = vmatpush.msra.mxu0 0.0
    %606 = vmatpush.msra.mxu0 0.0
    %607 = vmatpush.msra.mxu0 0.0
    %608 = vmatpush.msra.mxu0 0.0
    %609 = vmatpush.msra.mxu0 0.0
    %610 = vmatpush.msra.mxu0 0.0
    %v611 = vand.u32 %v220, 4294901760
    %v612 = vsub.f32 %v220, %v611
    %v613 = vand.u32 %v612, 4294901760
    %v614 = vsub.f32 %v612, %v613
    %v615 = vand.u32 %v614, 4294901760
    %616 = vmatpush.msra.mxu0 %v615
    %v617 = vand.u32 %v227, 4294901760
    %618 = vmatmul.f32.gmra.mxu0 %v617
    %v619 = vpop.f32.mrf.mxu0
    %v620 = vadd.f32 %v594, %v619
    %621 = vdwg.mxu0
    %622 = vmatpush.msra.mxu0 0.0
    %623 = vmatpush.msra.mxu0 0.0
    %624 = vmatpush.msra.mxu0 0.0
    %625 = vmatpush.msra.mxu0 0.0
    %626 = vmatpush.msra.mxu0 0.0
    %627 = vmatpush.msra.mxu0 0.0
    %628 = vmatpush.msra.mxu0 0.0
    %629 = vmatpush.msra.mxu0 0.0
    %630 = vmatpush.msra.mxu0 0.0
    %631 = vmatpush.msra.mxu0 0.0
    %632 = vmatpush.msra.mxu0 0.0
    %633 = vmatpush.msra.mxu0 0.0
    %634 = vmatpush.msra.mxu0 0.0
    %635 = vmatpush.msra.mxu0 0.0
    %636 = vmatpush.msra.mxu0 0.0
    %v637 = vand.u32 %v220, 4294901760
    %v638 = vsub.f32 %v220, %v637
    %639 = vmatpush.msra.mxu0 %v638
    %v640 = vand.u32 %v227, 4294901760
    %v641 = vsub.f32 %v227, %v640
    %642 = vmatmul.f32.gmra.mxu0 %v641
    %v643 = vpop.f32.mrf.mxu0
    %v644 = vadd.f32 %v620, %v643
    %645 = vdwg.mxu0
    %646 = vmatpush.msra.mxu0 0.0
    %647 = vmatpush.msra.mxu0 0.0
    %648 = vmatpush.msra.mxu0 0.0
    %649 = vmatpush.msra.mxu0 0.0
    %650 = vmatpush.msra.mxu0 0.0
    %651 = vmatpush.msra.mxu0 0.0
    %652 = vmatpush.msra.mxu0 0.0
    %653 = vmatpush.msra.mxu0 0.0
    %654 = vmatpush.msra.mxu0 0.0
    %655 = vmatpush.msra.mxu0 0.0
    %656 = vmatpush.msra.mxu0 0.0
    %657 = vmatpush.msra.mxu0 0.0
    %658 = vmatpush.msra.mxu0 0.0
    %659 = vmatpush.msra.mxu0 0.0
    %660 = vmatpush.msra.mxu0 0.0
    %v661 = vand.u32 %v220, 4294901760
    %662 = vmatpush.msra.mxu0 %v661
    %v663 = vand.u32 %v227, 4294901760
    %v664 = vsub.f32 %v227, %v663
    %v665 = vand.u32 %v664, 4294901760
    %666 = vmatmul.f32.gmra.mxu0 %v665
    %v667 = vpop.f32.mrf.mxu0
    %v668 = vadd.f32 %v644, %v667
    %669 = vdwg.mxu0
    %670 = vmatpush.msra.mxu0 0.0
    %671 = vmatpush.msra.mxu0 0.0
    %672 = vmatpush.msra.mxu0 0.0
    %673 = vmatpush.msra.mxu0 0.0
    %674 = vmatpush.msra.mxu0 0.0
    %675 = vmatpush.msra.mxu0 0.0
    %676 = vmatpush.msra.mxu0 0.0
    %677 = vmatpush.msra.mxu0 0.0
    %678 = vmatpush.msra.mxu0 0.0
    %679 = vmatpush.msra.mxu0 0.0
    %680 = vmatpush.msra.mxu0 0.0
    %681 = vmatpush.msra.mxu0 0.0
    %682 = vmatpush.msra.mxu0 0.0
    %683 = vmatpush.msra.mxu0 0.0
    %684 = vmatpush.msra.mxu0 0.0
    %v685 = vand.u32 %v220, 4294901760
    %v686 = vsub.f32 %v220, %v685
    %v687 = vand.u32 %v686, 4294901760
    %688 = vmatpush.msra.mxu0 %v687
    %v689 = vand.u32 %v227, 4294901760
    %690 = vmatmul.f32.gmra.mxu0 %v689
    %v691 = vpop.f32.mrf.mxu0
    %v692 = vadd.f32 %v668, %v691
    %693 = vdwg.mxu0
    %694 = vmatpush.msra.mxu0 0.0
    %695 = vmatpush.msra.mxu0 0.0
    %696 = vmatpush.msra.mxu0 0.0
    %697 = vmatpush.msra.mxu0 0.0
    %698 = vmatpush.msra.mxu0 0.0
    %699 = vmatpush.msra.mxu0 0.0
    %700 = vmatpush.msra.mxu0 0.0
    %701 = vmatpush.msra.mxu0 0.0
    %702 = vmatpush.msra.mxu0 0.0
    %703 = vmatpush.msra.mxu0 0.0
    %704 = vmatpush.msra.mxu0 0.0
    %705 = vmatpush.msra.mxu0 0.0
    %706 = vmatpush.msra.mxu0 0.0
    %707 = vmatpush.msra.mxu0 0.0
    %708 = vmatpush.msra.mxu0 0.0
    %v709 = vand.u32 %v220, 4294901760
    %710 = vmatpush.msra.mxu0 %v709
    %v711 = vand.u32 %v227, 4294901760
    %712 = vmatmul.f32.gmra.mxu0 %v711
    %v713 = vpop.f32.mrf.mxu0
    %v714 = vadd.f32 %v692, %v713
    %715 = vdwg.mxu0
    %717 = vst [vmem:[#allocation1] ss:$4 sm:$0xff] %v122
    %v718 = vld.sshfl [vmem:[#allocation1] sm:$0xff pattern:$0x73625140]
    %v719 = vld.sshfl [vmem:[#allocation1 + $0x8] sm:$0xff pattern:$0x73625140]
    %v721 = vsel %vm226, %v719, 0
    %v723 = vand.u32 %v219, 4294901760
    %724 = vmatpush.msra.mxu0 %v723
    %v725 = vand.u32 %v218, 4294901760
    %726 = vmatpush.msra.mxu0 %v725
    %v727 = vand.u32 %v217, 4294901760
    %728 = vmatpush.msra.mxu0 %v727
    %v729 = vand.u32 %v216, 4294901760
    %730 = vmatpush.msra.mxu0 %v729
    %v731 = vand.u32 %v215, 4294901760
    %732 = vmatpush.msra.mxu0 %v731
    %v733 = vand.u32 %v214, 4294901760
    %734 = vmatpush.msra.mxu0 %v733
    %v735 = vand.u32 %v213, 4294901760
    %736 = vmatpush.msra.mxu0 %v735
    %v737 = vand.u32 %v212, 4294901760
    %738 = vmatpush.msra.mxu0 %v737
    %v739 = vand.u32 %v211, 4294901760
    %740 = vmatpush.msra.mxu0 %v739
    %v741 = vand.u32 %v210, 4294901760
    %742 = vmatpush.msra.mxu0 %v741
    %v743 = vand.u32 %v209, 4294901760
    %744 = vmatpush.msra.mxu0 %v743
    %v745 = vand.u32 %v208, 4294901760
    %746 = vmatpush.msra.mxu0 %v745
    %v747 = vand.u32 %v207, 4294901760
    %748 = vmatpush.msra.mxu0 %v747
    %v749 = vand.u32 %v206, 4294901760
    %750 = vmatpush.msra.mxu0 %v749
    %v751 = vand.u32 %v205, 4294901760
    %752 = vmatpush.msra.mxu0 %v751
    %v753 = vand.u32 %v204, 4294901760
    %754 = vmatpush.msra.mxu0 %v753
    %v755 = vand.u32 %v718, 4294901760
    %v756 = vsub.f32 %v718, %v755
    %v757 = vand.u32 %v756, 4294901760
    %v758 = vsub.f32 %v756, %v757
    %v759 = vand.u32 %v758, 4294901760
    %760 = vmatmul.f32.gmra.mxu0 %v759
    %v761 = vpop.f32.mrf.mxu0
    %v762 = vadd.f32 0.0, %v761
    %763 = vdwg.mxu0
    %v764 = vand.u32 %v219, 4294901760
    %v765 = vsub.f32 %v219, %v764
    %v766 = vand.u32 %v765, 4294901760
    %v767 = vsub.f32 %v765, %v766
    %v768 = vand.u32 %v767, 4294901760
    %769 = vmatpush.msra.mxu0 %v768
    %v770 = vand.u32 %v218, 4294901760
    %v771 = vsub.f32 %v218, %v770
    %v772 = vand.u32 %v771, 4294901760
    %v773 = vsub.f32 %v771, %v772
    %v774 = vand.u32 %v773, 4294901760
    %775 = vmatpush.msra.mxu0 %v774
    %v776 = vand.u32 %v217, 4294901760
    %v777 = vsub.f32 %v217, %v776
    %v778 = vand.u32 %v777, 4294901760
    %v779 = vsub.f32 %v777, %v778
    %v780 = vand.u32 %v779, 4294901760
    %781 = vmatpush.msra.mxu0 %v780
    %v782 = vand.u32 %v216, 4294901760
    %v783 = vsub.f32 %v216, %v782
    %v784 = vand.u32 %v783, 4294901760
    %v785 = vsub.f32 %v783, %v784
    %v786 = vand.u32 %v785, 4294901760
    %787 = vmatpush.msra.mxu0 %v786
    %v788 = vand.u32 %v215, 4294901760
    %v789 = vsub.f32 %v215, %v788
    %v790 = vand.u32 %v789, 4294901760
    %v791 = vsub.f32 %v789, %v790
    %v792 = vand.u32 %v791, 4294901760
    %793 = vmatpush.msra.mxu0 %v792
    %v794 = vand.u32 %v214, 4294901760
    %v795 = vsub.f32 %v214, %v794
    %v796 = vand.u32 %v795, 4294901760
    %v797 = vsub.f32 %v795, %v796
    %v798 = vand.u32 %v797, 4294901760
    %799 = vmatpush.msra.mxu0 %v798
    %v800 = vand.u32 %v213, 4294901760
    %v801 = vsub.f32 %v213, %v800
    %v802 = vand.u32 %v801, 4294901760
    %v803 = vsub.f32 %v801, %v802
    %v804 = vand.u32 %v803, 4294901760
    %805 = vmatpush.msra.mxu0 %v804
    %v806 = vand.u32 %v212, 4294901760
    %v807 = vsub.f32 %v212, %v806
    %v808 = vand.u32 %v807, 4294901760
    %v809 = vsub.f32 %v807, %v808
    %v810 = vand.u32 %v809, 4294901760
    %811 = vmatpush.msra.mxu0 %v810
    %v812 = vand.u32 %v211, 4294901760
    %v813 = vsub.f32 %v211, %v812
    %v814 = vand.u32 %v813, 4294901760
    %v815 = vsub.f32 %v813, %v814
    %v816 = vand.u32 %v815, 4294901760
    %817 = vmatpush.msra.mxu0 %v816
    %v818 = vand.u32 %v210, 4294901760
    %v819 = vsub.f32 %v210, %v818
    %v820 = vand.u32 %v819, 4294901760
    %v821 = vsub.f32 %v819, %v820
    %v822 = vand.u32 %v821, 4294901760
    %823 = vmatpush.msra.mxu0 %v822
    %v824 = vand.u32 %v209, 4294901760
    %v825 = vsub.f32 %v209, %v824
    %v826 = vand.u32 %v825, 4294901760
    %v827 = vsub.f32 %v825, %v826
    %v828 = vand.u32 %v827, 4294901760
    %829 = vmatpush.msra.mxu0 %v828
    %v830 = vand.u32 %v208, 4294901760
    %v831 = vsub.f32 %v208, %v830
    %v832 = vand.u32 %v831, 4294901760
    %v833 = vsub.f32 %v831, %v832
    %v834 = vand.u32 %v833, 4294901760
    %835 = vmatpush.msra.mxu0 %v834
    %v836 = vand.u32 %v207, 4294901760
    %v837 = vsub.f32 %v207, %v836
    %v838 = vand.u32 %v837, 4294901760
    %v839 = vsub.f32 %v837, %v838
    %v840 = vand.u32 %v839, 4294901760
    %841 = vmatpush.msra.mxu0 %v840
    %v842 = vand.u32 %v206, 4294901760
    %v843 = vsub.f32 %v206, %v842
    %v844 = vand.u32 %v843, 4294901760
    %v845 = vsub.f32 %v843, %v844
    %v846 = vand.u32 %v845, 4294901760
    %847 = vmatpush.msra.mxu0 %v846
    %v848 = vand.u32 %v205, 4294901760
    %v849 = vsub.f32 %v205, %v848
    %v850 = vand.u32 %v849, 4294901760
    %v851 = vsub.f32 %v849, %v850
    %v852 = vand.u32 %v851, 4294901760
    %853 = vmatpush.msra.mxu0 %v852
    %v854 = vand.u32 %v204, 4294901760
    %v855 = vsub.f32 %v204, %v854
    %v856 = vand.u32 %v855, 4294901760
    %v857 = vsub.f32 %v855, %v856
    %v858 = vand.u32 %v857, 4294901760
    %859 = vmatpush.msra.mxu0 %v858
    %v860 = vand.u32 %v718, 4294901760
    %861 = vmatmul.f32.gmra.mxu0 %v860
    %v862 = vpop.f32.mrf.mxu0
    %v863 = vadd.f32 %v762, %v862
    %864 = vdwg.mxu0
    %v865 = vand.u32 %v219, 4294901760
    %v866 = vsub.f32 %v219, %v865
    %867 = vmatpush.msra.mxu0 %v866
    %v868 = vand.u32 %v218, 4294901760
    %v869 = vsub.f32 %v218, %v868
    %870 = vmatpush.msra.mxu0 %v869
    %v871 = vand.u32 %v217, 4294901760
    %v872 = vsub.f32 %v217, %v871
    %873 = vmatpush.msra.mxu0 %v872
    %v874 = vand.u32 %v216, 4294901760
    %v875 = vsub.f32 %v216, %v874
    %876 = vmatpush.msra.mxu0 %v875
    %v877 = vand.u32 %v215, 4294901760
    %v878 = vsub.f32 %v215, %v877
    %879 = vmatpush.msra.mxu0 %v878
    %v880 = vand.u32 %v214, 4294901760
    %v881 = vsub.f32 %v214, %v880
    %882 = vmatpush.msra.mxu0 %v881
    %v883 = vand.u32 %v213, 4294901760
    %v884 = vsub.f32 %v213, %v883
    %885 = vmatpush.msra.mxu0 %v884
    %v886 = vand.u32 %v212, 4294901760
    %v887 = vsub.f32 %v212, %v886
    %888 = vmatpush.msra.mxu0 %v887
    %v889 = vand.u32 %v211, 4294901760
    %v890 = vsub.f32 %v211, %v889
    %891 = vmatpush.msra.mxu0 %v890
    %v892 = vand.u32 %v210, 4294901760
    %v893 = vsub.f32 %v210, %v892
    %894 = vmatpush.msra.mxu0 %v893
    %v895 = vand.u32 %v209, 4294901760
    %v896 = vsub.f32 %v209, %v895
    %897 = vmatpush.msra.mxu0 %v896
    %v898 = vand.u32 %v208, 4294901760
    %v899 = vsub.f32 %v208, %v898
    %900 = vmatpush.msra.mxu0 %v899
    %v901 = vand.u32 %v207, 4294901760
    %v902 = vsub.f32 %v207, %v901
    %903 = vmatpush.msra.mxu0 %v902
    %v904 = vand.u32 %v206, 4294901760
    %v905 = vsub.f32 %v206, %v904
    %906 = vmatpush.msra.mxu0 %v905
    %v907 = vand.u32 %v205, 4294901760
    %v908 = vsub.f32 %v205, %v907
    %909 = vmatpush.msra.mxu0 %v908
    %v910 = vand.u32 %v204, 4294901760
    %v911 = vsub.f32 %v204, %v910
    %912 = vmatpush.msra.mxu0 %v911
    %v913 = vand.u32 %v718, 4294901760
    %v914 = vsub.f32 %v718, %v913
    %915 = vmatmul.f32.gmra.mxu0 %v914
    %v916 = vpop.f32.mrf.mxu0
    %v917 = vadd.f32 %v863, %v916
    %918 = vdwg.mxu0
    %v919 = vand.u32 %v219, 4294901760
    %920 = vmatpush.msra.mxu0 %v919
    %v921 = vand.u32 %v218, 4294901760
    %922 = vmatpush.msra.mxu0 %v921
    %v923 = vand.u32 %v217, 4294901760
    %924 = vmatpush.msra.mxu0 %v923
    %v925 = vand.u32 %v216, 4294901760
    %926 = vmatpush.msra.mxu0 %v925
    %v927 = vand.u32 %v215, 4294901760
    %928 = vmatpush.msra.mxu0 %v927
    %v929 = vand.u32 %v214, 4294901760
    %930 = vmatpush.msra.mxu0 %v929
    %v931 = vand.u32 %v213, 4294901760
    %932 = vmatpush.msra.mxu0 %v931
    %v933 = vand.u32 %v212, 4294901760
    %934 = vmatpush.msra.mxu0 %v933
    %v935 = vand.u32 %v211, 4294901760
    %936 = vmatpush.msra.mxu0 %v935
    %v937 = vand.u32 %v210, 4294901760
    %938 = vmatpush.msra.mxu0 %v937
    %v939 = vand.u32 %v209, 4294901760
    %940 = vmatpush.msra.mxu0 %v939
    %v941 = vand.u32 %v208, 4294901760
    %942 = vmatpush.msra.mxu0 %v941
    %v943 = vand.u32 %v207, 4294901760
    %944 = vmatpush.msra.mxu0 %v943
    %v945 = vand.u32 %v206, 4294901760
    %946 = vmatpush.msra.mxu0 %v945
    %v947 = vand.u32 %v205, 4294901760
    %948 = vmatpush.msra.mxu0 %v947
    %v949 = vand.u32 %v204, 4294901760
    %950 = vmatpush.msra.mxu0 %v949
    %v951 = vand.u32 %v718, 4294901760
    %v952 = vsub.f32 %v718, %v951
    %v953 = vand.u32 %v952, 4294901760
    %954 = vmatmul.f32.gmra.mxu0 %v953
    %v955 = vpop.f32.mrf.mxu0
    %v956 = vadd.f32 %v917, %v955
    %957 = vdwg.mxu0
    %v958 = vand.u32 %v219, 4294901760
    %v959 = vsub.f32 %v219, %v958
    %v960 = vand.u32 %v959, 4294901760
    %961 = vmatpush.msra.mxu0 %v960
    %v962 = vand.u32 %v218, 4294901760
    %v963 = vsub.f32 %v218, %v962
    %v964 = vand.u32 %v963, 4294901760
    %965 = vmatpush.msra.mxu0 %v964
    %v966 = vand.u32 %v217, 4294901760
    %v967 = vsub.f32 %v217, %v966
    %v968 = vand.u32 %v967, 4294901760
    %969 = vmatpush.msra.mxu0 %v968
    %v970 = vand.u32 %v216, 4294901760
    %v971 = vsub.f32 %v216, %v970
    %v972 = vand.u32 %v971, 4294901760
    %973 = vmatpush.msra.mxu0 %v972
    %v974 = vand.u32 %v215, 4294901760
    %v975 = vsub.f32 %v215, %v974
    %v976 = vand.u32 %v975, 4294901760
    %977 = vmatpush.msra.mxu0 %v976
    %v978 = vand.u32 %v214, 4294901760
    %v979 = vsub.f32 %v214, %v978
    %v980 = vand.u32 %v979, 4294901760
    %981 = vmatpush.msra.mxu0 %v980
    %v982 = vand.u32 %v213, 4294901760
    %v983 = vsub.f32 %v213, %v982
    %v984 = vand.u32 %v983, 4294901760
    %985 = vmatpush.msra.mxu0 %v984
    %v986 = vand.u32 %v212, 4294901760
    %v987 = vsub.f32 %v212, %v986
    %v988 = vand.u32 %v987, 4294901760
    %989 = vmatpush.msra.mxu0 %v988
    %v990 = vand.u32 %v211, 4294901760
    %v991 = vsub.f32 %v211, %v990
    %v992 = vand.u32 %v991, 4294901760
    %993 = vmatpush.msra.mxu0 %v992
    %v994 = vand.u32 %v210, 4294901760
    %v995 = vsub.f32 %v210, %v994
    %v996 = vand.u32 %v995, 4294901760
    %997 = vmatpush.msra.mxu0 %v996
    %v998 = vand.u32 %v209, 4294901760
    %v999 = vsub.f32 %v209, %v998
    %v1000 = vand.u32 %v999, 4294901760
    %1001 = vmatpush.msra.mxu0 %v1000
    %v1002 = vand.u32 %v208, 4294901760
    %v1003 = vsub.f32 %v208, %v1002
    %v1004 = vand.u32 %v1003, 4294901760
    %1005 = vmatpush.msra.mxu0 %v1004
    %v1006 = vand.u32 %v207, 4294901760
    %v1007 = vsub.f32 %v207, %v1006
    %v1008 = vand.u32 %v1007, 4294901760
    %1009 = vmatpush.msra.mxu0 %v1008
    %v1010 = vand.u32 %v206, 4294901760
    %v1011 = vsub.f32 %v206, %v1010
    %v1012 = vand.u32 %v1011, 4294901760
    %1013 = vmatpush.msra.mxu0 %v1012
    %v1014 = vand.u32 %v205, 4294901760
    %v1015 = vsub.f32 %v205, %v1014
    %v1016 = vand.u32 %v1015, 4294901760
    %1017 = vmatpush.msra.mxu0 %v1016
    %v1018 = vand.u32 %v204, 4294901760
    %v1019 = vsub.f32 %v204, %v1018
    %v1020 = vand.u32 %v1019, 4294901760
    %1021 = vmatpush.msra.mxu0 %v1020
    %v1022 = vand.u32 %v718, 4294901760
    %1023 = vmatmul.f32.gmra.mxu0 %v1022
    %v1024 = vpop.f32.mrf.mxu0
    %v1025 = vadd.f32 %v956, %v1024
    %1026 = vdwg.mxu0
    %v1027 = vand.u32 %v219, 4294901760
    %1028 = vmatpush.msra.mxu0 %v1027
    %v1029 = vand.u32 %v218, 4294901760
    %1030 = vmatpush.msra.mxu0 %v1029
    %v1031 = vand.u32 %v217, 4294901760
    %1032 = vmatpush.msra.mxu0 %v1031
    %v1033 = vand.u32 %v216, 4294901760
    %1034 = vmatpush.msra.mxu0 %v1033
    %v1035 = vand.u32 %v215, 4294901760
    %1036 = vmatpush.msra.mxu0 %v1035
    %v1037 = vand.u32 %v214, 4294901760
    %1038 = vmatpush.msra.mxu0 %v1037
    %v1039 = vand.u32 %v213, 4294901760
    %1040 = vmatpush.msra.mxu0 %v1039
    %v1041 = vand.u32 %v212, 4294901760
    %1042 = vmatpush.msra.mxu0 %v1041
    %v1043 = vand.u32 %v211, 4294901760
    %1044 = vmatpush.msra.mxu0 %v1043
    %v1045 = vand.u32 %v210, 4294901760
    %1046 = vmatpush.msra.mxu0 %v1045
    %v1047 = vand.u32 %v209, 4294901760
    %1048 = vmatpush.msra.mxu0 %v1047
    %v1049 = vand.u32 %v208, 4294901760
    %1050 = vmatpush.msra.mxu0 %v1049
    %v1051 = vand.u32 %v207, 4294901760
    %1052 = vmatpush.msra.mxu0 %v1051
    %v1053 = vand.u32 %v206, 4294901760
    %1054 = vmatpush.msra.mxu0 %v1053
    %v1055 = vand.u32 %v205, 4294901760
    %1056 = vmatpush.msra.mxu0 %v1055
    %v1057 = vand.u32 %v204, 4294901760
    %1058 = vmatpush.msra.mxu0 %v1057
    %v1059 = vand.u32 %v718, 4294901760
    %1060 = vmatmul.f32.gmra.mxu0 %v1059
    %v1061 = vpop.f32.mrf.mxu0
    %v1062 = vadd.f32 %v1025, %v1061
    %1063 = vdwg.mxu0
    %1064 = vmatpush.msra.mxu0 0.0
    %1065 = vmatpush.msra.mxu0 0.0
    %1066 = vmatpush.msra.mxu0 0.0
    %1067 = vmatpush.msra.mxu0 0.0
    %1068 = vmatpush.msra.mxu0 0.0
    %1069 = vmatpush.msra.mxu0 0.0
    %1070 = vmatpush.msra.mxu0 0.0
    %1071 = vmatpush.msra.mxu0 0.0
    %1072 = vmatpush.msra.mxu0 0.0
    %1073 = vmatpush.msra.mxu0 0.0
    %1074 = vmatpush.msra.mxu0 0.0
    %1075 = vmatpush.msra.mxu0 0.0
    %1076 = vmatpush.msra.mxu0 0.0
    %1077 = vmatpush.msra.mxu0 0.0
    %1078 = vmatpush.msra.mxu0 0.0
    %v1079 = vand.u32 %v220, 4294901760
    %1080 = vmatpush.msra.mxu0 %v1079
    %v1081 = vand.u32 %v721, 4294901760
    %v1082 = vsub.f32 %v721, %v1081
    %v1083 = vand.u32 %v1082, 4294901760
    %v1084 = vsub.f32 %v1082, %v1083
    %v1085 = vand.u32 %v1084, 4294901760
    %1086 = vmatmul.f32.gmra.mxu0 %v1085
    %v1087 = vpop.f32.mrf.mxu0
    %v1088 = vadd.f32 %v1062, %v1087
    %1089 = vdwg.mxu0
    %1090 = vmatpush.msra.mxu0 0.0
    %1091 = vmatpush.msra.mxu0 0.0
    %1092 = vmatpush.msra.mxu0 0.0
    %1093 = vmatpush.msra.mxu0 0.0
    %1094 = vmatpush.msra.mxu0 0.0
    %1095 = vmatpush.msra.mxu0 0.0
    %1096 = vmatpush.msra.mxu0 0.0
    %1097 = vmatpush.msra.mxu0 0.0
    %1098 = vmatpush.msra.mxu0 0.0
    %1099 = vmatpush.msra.mxu0 0.0
    %1100 = vmatpush.msra.mxu0 0.0
    %1101 = vmatpush.msra.mxu0 0.0
    %1102 = vmatpush.msra.mxu0 0.0
    %1103 = vmatpush.msra.mxu0 0.0
    %1104 = vmatpush.msra.mxu0 0.0
    %v1105 = vand.u32 %v220, 4294901760
    %v1106 = vsub.f32 %v220, %v1105
    %v1107 = vand.u32 %v1106, 4294901760
    %v1108 = vsub.f32 %v1106, %v1107
    %v1109 = vand.u32 %v1108, 4294901760
    %1110 = vmatpush.msra.mxu0 %v1109
    %v1111 = vand.u32 %v721, 4294901760
    %1112 = vmatmul.f32.gmra.mxu0 %v1111
    %v1113 = vpop.f32.mrf.mxu0
    %v1114 = vadd.f32 %v1088, %v1113
    %1115 = vdwg.mxu0
    %1116 = vmatpush.msra.mxu0 0.0
    %1117 = vmatpush.msra.mxu0 0.0
    %1118 = vmatpush.msra.mxu0 0.0
    %1119 = vmatpush.msra.mxu0 0.0
    %1120 = vmatpush.msra.mxu0 0.0
    %1121 = vmatpush.msra.mxu0 0.0
    %1122 = vmatpush.msra.mxu0 0.0
    %1123 = vmatpush.msra.mxu0 0.0
    %1124 = vmatpush.msra.mxu0 0.0
    %1125 = vmatpush.msra.mxu0 0.0
    %1126 = vmatpush.msra.mxu0 0.0
    %1127 = vmatpush.msra.mxu0 0.0
    %1128 = vmatpush.msra.mxu0 0.0
    %1129 = vmatpush.msra.mxu0 0.0
    %1130 = vmatpush.msra.mxu0 0.0
    %v1131 = vand.u32 %v220, 4294901760
    %v1132 = vsub.f32 %v220, %v1131
    %1133 = vmatpush.msra.mxu0 %v1132
    %v1134 = vand.u32 %v721, 4294901760
    %v1135 = vsub.f32 %v721, %v1134
    %1136 = vmatmul.f32.gmra.mxu0 %v1135
    %v1137 = vpop.f32.mrf.mxu0
    %v1138 = vadd.f32 %v1114, %v1137
    %1139 = vdwg.mxu0
    %1140 = vmatpush.msra.mxu0 0.0
    %1141 = vmatpush.msra.mxu0 0.0
    %1142 = vmatpush.msra.mxu0 0.0
    %1143 = vmatpush.msra.mxu0 0.0
    %1144 = vmatpush.msra.mxu0 0.0
    %1145 = vmatpush.msra.mxu0 0.0
    %1146 = vmatpush.msra.mxu0 0.0
    %1147 = vmatpush.msra.mxu0 0.0
    %1148 = vmatpush.msra.mxu0 0.0
    %1149 = vmatpush.msra.mxu0 0.0
    %1150 = vmatpush.msra.mxu0 0.0
    %1151 = vmatpush.msra.mxu0 0.0
    %1152 = vmatpush.msra.mxu0 0.0
    %1153 = vmatpush.msra.mxu0 0.0
    %1154 = vmatpush.msra.mxu0 0.0
    %v1155 = vand.u32 %v220, 4294901760
    %1156 = vmatpush.msra.mxu0 %v1155
    %v1157 = vand.u32 %v721, 4294901760
    %v1158 = vsub.f32 %v721, %v1157
    %v1159 = vand.u32 %v1158, 4294901760
    %1160 = vmatmul.f32.gmra.mxu0 %v1159
    %v1161 = vpop.f32.mrf.mxu0
    %v1162 = vadd.f32 %v1138, %v1161
    %1163 = vdwg.mxu0
    %1164 = vmatpush.msra.mxu0 0.0
    %1165 = vmatpush.msra.mxu0 0.0
    %1166 = vmatpush.msra.mxu0 0.0
    %1167 = vmatpush.msra.mxu0 0.0
    %1168 = vmatpush.msra.mxu0 0.0
    %1169 = vmatpush.msra.mxu0 0.0
    %1170 = vmatpush.msra.mxu0 0.0
    %1171 = vmatpush.msra.mxu0 0.0
    %1172 = vmatpush.msra.mxu0 0.0
    %1173 = vmatpush.msra.mxu0 0.0
    %1174 = vmatpush.msra.mxu0 0.0
    %1175 = vmatpush.msra.mxu0 0.0
    %1176 = vmatpush.msra.mxu0 0.0
    %1177 = vmatpush.msra.mxu0 0.0
    %1178 = vmatpush.msra.mxu0 0.0
    %v1179 = vand.u32 %v220, 4294901760
    %v1180 = vsub.f32 %v220, %v1179
    %v1181 = vand.u32 %v1180, 4294901760
    %1182 = vmatpush.msra.mxu0 %v1181
    %v1183 = vand.u32 %v721, 4294901760
    %1184 = vmatmul.f32.gmra.mxu0 %v1183
    %v1185 = vpop.f32.mrf.mxu0
    %v1186 = vadd.f32 %v1162, %v1185
    %1187 = vdwg.mxu0
    %1188 = vmatpush.msra.mxu0 0.0
    %1189 = vmatpush.msra.mxu0 0.0
    %1190 = vmatpush.msra.mxu0 0.0
    %1191 = vmatpush.msra.mxu0 0.0
    %1192 = vmatpush.msra.mxu0 0.0
    %1193 = vmatpush.msra.mxu0 0.0
    %1194 = vmatpush.msra.mxu0 0.0
    %1195 = vmatpush.msra.mxu0 0.0
    %1196 = vmatpush.msra.mxu0 0.0
    %1197 = vmatpush.msra.mxu0 0.0
    %1198 = vmatpush.msra.mxu0 0.0
    %1199 = vmatpush.msra.mxu0 0.0
    %1200 = vmatpush.msra.mxu0 0.0
    %1201 = vmatpush.msra.mxu0 0.0
    %1202 = vmatpush.msra.mxu0 0.0
    %v1203 = vand.u32 %v220, 4294901760
    %1204 = vmatpush.msra.mxu0 %v1203
    %v1205 = vand.u32 %v721, 4294901760
    %1206 = vmatmul.f32.gmra.mxu0 %v1205
    %v1207 = vpop.f32.mrf.mxu0
    %v1208 = vadd.f32 %v1186, %v1207
    %1209 = vdwg.mxu0
    %v1210 = vmul.f32 %v714, %v714
    %1212 = vrot.lane.b32.xlu0 %v1210, 121
    %v1213 = vpop.permute.xlu0 %1212
    %v1215 = vadd.f32 %v1210, %v1213
    %v1216 = vrsqrt.pop %v1215
    %v1217 = vmul.f32 %v1216, %v1215
    %v1218 = vmul.f32 %v1217, %v1216
    %v1219 = vmul.f32 0.5, %v1218
    %v1220 = vsub.f32 1.5, %v1219
    %v1221 = vmul.f32 %v1216, %v1220
    %v1222 = vmul.f32 %v1215, %v1221
    %vm1223 = vcmp.eq.f32.partialorder %v1215, inf
    %v1224 = vsel %vm1223, %v1215, %v1222
    %vm1225 = vcmp.eq.f32.partialorder %v1215, 0.0
    %v1226 = vand.u32 %v1215, 2147483648
    %v1227 = vsel %vm1225, %v1226, %v1224
    %v1228 = vmul.f32 %v1208, %v1208
    %1230 = vrot.lane.b32.xlu0 %v1228, 121
    %v1231 = vpop.permute.xlu0 %1230
    %v1233 = vadd.f32 %v1228, %v1231
    %v1234 = vrsqrt.pop %v1233
    %v1235 = vmul.f32 %v1234, %v1233
    %v1236 = vmul.f32 %v1235, %v1234
    %v1237 = vmul.f32 0.5, %v1236
    %v1238 = vsub.f32 1.5, %v1237
    %v1239 = vmul.f32 %v1234, %v1238
    %v1240 = vmul.f32 %v1233, %v1239
    %vm1241 = vcmp.eq.f32.partialorder %v1233, inf
    %v1242 = vsel %vm1241, %v1233, %v1240
    %vm1243 = vcmp.eq.f32.partialorder %v1233, 0.0
    %v1244 = vand.u32 %v1233, 2147483648
    %v1245 = vsel %vm1243, %v1244, %v1242
    %v1246 = vsub.f32 %v1227, %v1245
    %v1247 = vand.u32 2147483647, %v1246
    %vm1248 = vcmask 25600
    %v1249 = vsel %vm1248, %v1247, 0.0
    %1250 = vadd.xlane.f32.xlu0 %v1249
    %v1251 = vpop.xlane.xlu0 %1250
    %v1252 = vrot.slane %v1251, 4
    %v1253 = vadd.f32 %v1251, %v1252
    %v1254 = vrot.slane %v1253, 2
    %v1255 = vadd.f32 %v1253, %v1254
    %v1256 = vrot.slane %v1255, 1
    %v1257 = vadd.f32 %v1255, %v1256
    %s1258 = vtos %v1257
    %s1259 = smul.f32 %s1258, 0.0125
    %1261 = vrot.lane.b32.xlu0 %v1247, 124
    %v1262 = vpop.permute.xlu0 %1261
    %vm1264 = vcmask 17408
    %v1265 = vsel %vm1264, %v1262, 0.0
    %1266 = vadd.xlane.f32.xlu0 %v1265
    %v1267 = vpop.xlane.xlu0 %1266
    %v1268 = vrot.slane %v1267, 4
    %v1269 = vadd.f32 %v1267, %v1268
    %v1270 = vrot.slane %v1269, 2
    %v1271 = vadd.f32 %v1269, %v1270
    %v1272 = vrot.slane %v1271, 1
    %v1273 = vadd.f32 %v1271, %v1272
    %s1274 = vtos %v1273
    %s1275 = smul.f32 %s1274, 0.016666668
    %s1276 = sadd.f32 %s120, %s159
    %s1277 = sadd.f32 %s1276, %s189
    %s1278 = sadd.f32 %s1277, %s203
    %s1279 = sadd.f32 %s1278, %s1259
    %s1280 = sadd.f32 %s1279, %s1275
    %s1281 = scalar_lea.smem [#allocation2], 0
    %1282 = sst [smem:[%s1281]] %s1280
    // Predicated region
    $region34: #{optimization_loss.1} parent=1 // pred_check
      _
    $region35: #{optimization_loss.1} parent=1 // pred_check_branch
      %1284 = sbr.rel (0) target = $region37
    $region36: #{optimization_loss.1} parent=1 // pred_region
      %1286 = vsyncadd [#allocation3], 0
      %s1288 = sshll.u32 %s8, 4
      %s1289 = int_to_ptr.hbm [resolvable:$true] %s1288
      %1291 = dma.smem_to_hbm [#allocation2], 16, %s1289, [#allocation3]
    $region37: #{optimization_loss.1} parent=1 // pred_fallthru
      _
    // Predicated region
    $region38: #{optimization_loss.1} parent=1 // pred_check
      _
    $region39: #{optimization_loss.1} parent=1 // pred_check_branch
      %1293 = sbr.rel (0) target = $region41
    $region40: #{optimization_loss.1} parent=1 // pred_region
      %1295 = dma.done [#allocation3], 16
    $region41: #{optimization_loss.1} parent=1 // pred_fallthru
      _
    %1296 = sfence
    %1297 = vsyncpa [#allocation3], 1

</llo_original>
